<compile_context>
chip_gen: v5e
topology: v5e:2x2
jax: 0.10.0
libtpu: 0.0.40
codegen_flags: <defaults>
</compile_context>

<pallas_src>
import functools

import jax
import jax.numpy as jnp
from jax import lax
from jax.experimental import pallas as pl
from jax.experimental.pallas import tpu as pltpu

_EPS = 1e-5


# ----------------------------------------------------------------------------
# small helpers
# ----------------------------------------------------------------------------
def _vmem_call(kernel, out_shape, *args):
    return pl.pallas_call(
        kernel,
        out_shape=out_shape,
        in_specs=[pl.BlockSpec(memory_space=pltpu.MemorySpace.VMEM)] * len(args),
        out_specs=pl.BlockSpec(memory_space=pltpu.MemorySpace.VMEM),
    )(*args)


@functools.lru_cache(maxsize=None)
def _roll_is_forward():
    """True iff pltpu.roll(x, +1, axis=0) matches jnp.roll(x, +1, axis=0).

    One tiny calibration kernel so the depthwise tap shifts are correct under
    either sign convention of the sublane rotate.  Primed eagerly in __main__
    (outside jit tracing) so the cached Python bool is reused while tracing.
    """
    def k(x_ref, o_ref):
        o_ref[...] = pltpu.roll(x_ref[...], shift=1, axis=0)

    x = jnp.arange(8 * 128, dtype=jnp.float32).reshape(8, 128)
    y = _vmem_call(k, jax.ShapeDtypeStruct((8, 128), jnp.float32), x)
    return bool(jnp.all(y == jnp.roll(x, 1, axis=0)))


def _bn_relu_rows(y, g, b):
    """Training-mode BN over rows (single pass) + ReLU.  y:[R,C], g,b:[1,C]."""
    inv_r = 1.0 / y.shape[0]
    mean = jnp.sum(y, axis=0, keepdims=True) * inv_r
    msq = jnp.sum(y * y, axis=0, keepdims=True) * inv_r
    var = msq - mean * mean                       # biased batch variance
    return jnp.maximum((y - mean) * lax.rsqrt(var + _EPS) * g + b, 0.0)


# ----------------------------------------------------------------------------
# Pallas kernels (whole problem fits in VMEM at these sizes -> grid=())
# ----------------------------------------------------------------------------
def _matmul_bn_relu_kernel(x_ref, w_ref, g_ref, b_ref, o_ref):
    """(conv_bn) x:[R,K] @ w:[K,C] (bf16 operands, f32 accum) -> BN -> ReLU."""
    y = jnp.dot(x_ref[...], w_ref[...], preferred_element_type=jnp.float32)
    o_ref[...] = _bn_relu_rows(y, g_ref[...], b_ref[...])


def _conv_dw_kernel(*refs, n_planes, taps, ho, wo, roll_fwd):
    """(conv_dw) fused depthwise3x3 -> BN -> ReLU -> pointwise1x1 -> BN -> ReLU.

    The depthwise intermediate never leaves VMEM.  Inputs (all VMEM):
      refs[:n_planes]   flattened input planes [R, Cin] f32, rows ordered
                        (n, i, j) with output width `wo` / height `ho`
                        (1 plane for stride 1, 4 strided phases for stride 2)
      row_id, col_id    [R, 1] int32 output spatial coordinates per row
      w_dw              [9, Cin] f32 depthwise taps (index kh*3+kw)
      g1, b1            [1, Cin] f32 BN affine (after depthwise)
      w_pw              [Cin, Cout] bf16 pointwise weight
      g2, b2            [1, Cout] f32 BN affine (after pointwise)
      o_ref             [R, Cout] f32 output
    `taps` is static metadata (plane_idx, flat_shift, i_min, i_max, j_min,
    j_max): each tap is an XLU sublane rotate of its plane plus an iota-based
    boundary mask (replaces padded-copy sublane slices / 9x tap gathers).
    """
    plane_refs = refs[:n_planes]
    (row_ref, col_ref, wdw_ref, g1_ref, b1_ref,
     wpw_ref, g2_ref, b2_ref, o_ref) = refs[n_planes:]

    planes = [ref[...] for ref in plane_refs]
    r, cin = planes[0].shape
    row = row_ref[...]
    col = col_ref[...]
    wdw = wdw_ref[...]

    # depthwise 3x3 accumulation: VPU MACs + XLU rolls (MXU left free)
    acc = jnp.zeros((r, cin), jnp.float32)
    for k, (p_idx, shift, i_min, i_max, j_min, j_max) in enumerate(taps):
        v = planes[p_idx]
        if shift != 0:
            amt = (-shift) % r if roll_fwd else shift % r
            v = pltpu.roll(v, shift=amt, axis=0)
        conds = []
        if i_min > 0:
            conds.append(row >= i_min)
        if i_max < ho - 1:
            conds.append(row <= i_max)
        if j_min > 0:
            conds.append(col >= j_min)
        if j_max < wo - 1:
            conds.append(col <= j_max)
        if conds:
            cond = conds[0]
            for c in conds[1:]:
                cond = jnp.logical_and(cond, c)
            v = v * jnp.where(cond, 1.0, 0.0)          # [R,1] mask, lane-bcast
        acc = acc + v * wdw[k:k + 1, :]

    y = _bn_relu_rows(acc, g1_ref[...], b1_ref[...])   # stays in VMEM / vregs
    z = jnp.dot(y.astype(jnp.bfloat16), wpw_ref[...],  # MXU, f32 accumulation
                preferred_element_type=jnp.float32)
    o_ref[...] = _bn_relu_rows(z, g2_ref[...], b2_ref[...])


# ----------------------------------------------------------------------------
# wrappers: static tap metadata + pallas_call per layer
# ----------------------------------------------------------------------------
def _taps_stride1(h, w):
    """Taps for stride-1 depthwise 3x3 on a single flattened plane of width w."""
    taps = []
    for kh in range(3):
        for kw in range(3):
            dh, dw_ = kh - 1, kw - 1
            taps.append((0, dh * w + dw_,
                         max(0, -dh), min(h - 1, h - 1 - dh),
                         max(0, -dw_), min(w - 1, w - 1 - dw_)))
    return tuple(taps)


def _taps_stride2(ho, wo):
    """Taps for stride-2 depthwise 3x3 over 4 phase planes x[:, p::2, q::2]."""
    taps = []
    for kh in range(3):
        for kw in range(3):
            dh, dw_ = kh - 1, kw - 1
            p, di = (0, 0) if dh == 0 else (1, -1 if dh < 0 else 0)
            q, dj = (0, 0) if dw_ == 0 else (1, -1 if dw_ < 0 else 0)
            taps.append((p * 2 + q, di * wo + dj,
                         1 if dh == -1 else 0, ho - 1,
                         1 if dw_ == -1 else 0, wo - 1))
    return tuple(taps)


def conv_dw_fused(x_nhwc, p):
    """One conv_dw unit == ONE pallas_call (dw3x3+BN+ReLU + pw1x1+BN+ReLU)."""
    n, h, w, cin = x_nhwc.shape
    stride = p["stride"]
    cout = p["wpw"].shape[0]

    if stride == 1:
        ho, wo = h, w
        planes = [x_nhwc.reshape(n * h * w, cin)]
        taps = _taps_stride1(h, w)
    else:
        # 4 strided phase planes (total bytes == input) instead of a 9x tap stack.
        # TODO(synk): odd spatial sizes with stride 2 need ragged phase planes.
        assert stride == 2 and h % 2 == 0 and w % 2 == 0
        ho, wo = h // 2, w // 2
        planes = [x_nhwc[:, ph::2, pw_::2, :].reshape(n * ho * wo, cin)
                  for ph in (0, 1) for pw_ in (0, 1)]
        taps = _taps_stride2(ho, wo)

    r = n * ho * wo
    rid = jnp.arange(r, dtype=jnp.int32).reshape(r, 1)
    row_id = (rid // wo) % ho
    col_id = rid % wo

    wdw = jnp.transpose(p["wdw"][:, 0], (1, 2, 0)).reshape(9, cin)
    wpw = p["wpw"][:, :, 0, 0].T.astype(jnp.bfloat16)            # [cin, cout]
    g1 = p["g1"].reshape(1, cin).astype(jnp.float32)
    b1 = p["b1"].reshape(1, cin).astype(jnp.float32)
    g2 = p["g2"].reshape(1, cout).astype(jnp.float32)
    b2 = p["b2"].reshape(1, cout).astype(jnp.float32)

    kernel = functools.partial(_conv_dw_kernel, n_planes=len(planes), taps=taps,
                               ho=ho, wo=wo, roll_fwd=_roll_is_forward())
    out = _vmem_call(kernel, jax.ShapeDtypeStruct((r, cout), jnp.float32),
                     *planes, row_id, col_id, wdw.astype(jnp.float32),
                     g1, b1, wpw, g2, b2)
    return out.reshape(n, ho, wo, cout)


def _im2col(x_nhwc, stride):
    n, h, w, c = x_nhwc.shape
    ho = (h + 2 - 3) // stride + 1
    wo = (w + 2 - 3) // stride + 1
    xp = jnp.pad(x_nhwc, ((0, 0), (1, 1), (1, 1), (0, 0)))
    cols = [xp[:, kh:kh + stride * (ho - 1) + 1:stride,
               kw:kw + stride * (wo - 1) + 1:stride, :]
            for kh in range(3) for kw in range(3)]
    patches = jnp.stack(cols, axis=3)              # [n, ho, wo, 9, c]
    return patches.reshape(n * ho * wo, 9 * c), (n, ho, wo)


def conv_bn_fused(x_nhwc, p):
    """First layer (cin=3): im2col in XLA glue (tiny, K=27) + ONE
    matmul+BN+ReLU pallas_call with bf16 MXU operands."""
    cols, (n, ho, wo) = _im2col(x_nhwc, p["stride"])
    cout, cin = p["w"].shape[0], p["w"].shape[1]
    wmat = jnp.transpose(p["w"], (2, 3, 1, 0)).reshape(9 * cin, cout)
    g = p["g"].reshape(1, cout).astype(jnp.float32)
    b = p["b"].reshape(1, cout).astype(jnp.float32)
    y = _vmem_call(_matmul_bn_relu_kernel,
                   jax.ShapeDtypeStruct((n * ho * wo, cout), jnp.float32),
                   cols.astype(jnp.bfloat16), wmat.astype(jnp.bfloat16), g, b)
    return y.reshape(n, ho, wo, cout)


# ----------------------------------------------------------------------------
# MobBlock: config, deterministic params, Pallas forward, pure-JAX reference
# ----------------------------------------------------------------------------
def mobblock_config(ind):
    if ind == 0:
        return [("conv_bn", 3, 32, 2), ("conv_dw", 32, 64, 1),
                ("conv_dw", 64, 128, 1), ("conv_dw", 128, 128, 1)]
    elif ind == 1:
        return [("conv_dw", 128, 256, 2), ("conv_dw", 256, 256, 1)]
    elif ind == 2:
        return [("conv_dw", 256, 256, 2), ("conv_dw", 256, 256, 1)]
    else:
        return [("conv_dw", 256, 512, 2)] + [("conv_dw", 512, 512, 1)] * 5


def init_params(ind, key):
    params = []
    for kind, cin, cout, stride in mobblock_config(ind):
        if kind == "conv_bn":
            key, k1, k2, k3 = jax.random.split(key, 4)
            params.append(dict(
                kind=kind, stride=stride,
                w=0.1 * jax.random.normal(k1, (cout, cin, 3, 3), jnp.float32),
                g=1.0 + 0.1 * jax.random.normal(k2, (cout,), jnp.float32),
                b=0.1 * jax.random.normal(k3, (cout,), jnp.float32)))
        else:
            key, k1, k2, k3, k4, k5, k6 = jax.random.split(key, 7)
            params.append(dict(
                kind=kind, stride=stride,
                wdw=0.1 * jax.random.normal(k1, (cin, 1, 3, 3), jnp.float32),
                g1=1.0 + 0.1 * jax.random.normal(k2, (cin,), jnp.float32),
                b1=0.1 * jax.random.normal(k3, (cin,), jnp.float32),
                wpw=0.1 * jax.random.normal(k4, (cout, cin, 1, 1), jnp.float32),
                g2=1.0 + 0.1 * jax.random.normal(k5, (cout,), jnp.float32),
                b2=0.1 * jax.random.normal(k6, (cout,), jnp.float32)))
    return params


def forward_pallas(x_nchw, params):
    x = jnp.transpose(x_nchw, (0, 2, 3, 1)).astype(jnp.float32)  # NCHW -> NHWC
    for p in params:
        if p["kind"] == "conv_bn":
            x = conv_bn_fused(x, p)
        else:
            x = conv_dw_fused(x, p)
    return jnp.transpose(x, (0, 3, 1, 2))                         # NHWC -> NCHW


def _bn_train_ref(y, g, b):
    mean = jnp.mean(y, axis=(0, 2, 3), keepdims=True)
    var = jnp.mean((y - mean) ** 2, axis=(0, 2, 3), keepdims=True)
    yn = (y - mean) / jnp.sqrt(var + _EPS)
    return yn * g[None, :, None, None] + b[None, :, None, None]


def forward_reference(x, params):
    dn = ("NCHW", "OIHW", "NCHW")
    hi = lax.Precision.HIGHEST
    for p in params:
        if p["kind"] == "conv_bn":
            y = lax.conv_general_dilated(x, p["w"], (p["stride"],) * 2,
                                         ((1, 1), (1, 1)), dimension_numbers=dn,
                                         precision=hi)
            x = jax.nn.relu(_bn_train_ref(y, p["g"], p["b"]))
        else:
            cin = x.shape[1]
            y = lax.conv_general_dilated(x, p["wdw"], (p["stride"],) * 2,
                                         ((1, 1), (1, 1)), dimension_numbers=dn,
                                         feature_group_count=cin, precision=hi)
            y = jax.nn.relu(_bn_train_ref(y, p["g1"], p["b1"]))
            y = lax.conv_general_dilated(y, p["wpw"], (1, 1), ((0, 0), (0, 0)),
                                         dimension_numbers=dn, precision=hi)
            x = jax.nn.relu(_bn_train_ref(y, p["g2"], p["b2"]))
    return x


if __name__ == "__main__":
    ind = 0
    key = jax.random.PRNGKey(0)
    key, kx = jax.random.split(key)
    x = jax.random.normal(kx, (2, 3, 16, 16), jnp.float32)  # NCHW like PyTorch
    params = init_params(ind, key)

    _ = _roll_is_forward()   # resolve roll sign eagerly (outside jit tracing)

    fwd = jax.jit(lambda inp: forward_pallas(inp, params))
    out = jax.block_until_ready(fwd(x))
    assert out.shape == (2, 128, 8, 8), out.shape

    ref = forward_reference(x, params)
    err = float(jnp.max(jnp.abs(out - ref)))
    # bf16 MXU operands vs f32-HIGHEST reference: observed error is O(1e-2).
    assert err < 5e-2, f"max abs err too large: {err}"

    print("KERNEL_OK")
</pallas_src>

<mosaic_0001>
module attributes {stable_mosaic.version = 11 : i64} {
  func.func @k(%arg0: memref<8x128xf32, #tpu.memory_space<vmem>>, %arg1: memref<8x128xf32, #tpu.memory_space<vmem>>) attributes {dimension_semantics = [], scalar_prefetch = 0 : i64, scratch_operands = 0 : i64, tpu.core_type = #tpu.core_type<tc>} {
    %c0 = arith.constant 0 : index
    %c0_0 = arith.constant 0 : index
    %0 = vector.load %arg0[%c0, %c0_0] : memref<8x128xf32, #tpu.memory_space<vmem>>, vector<8x128xf32>
    %c1_i32 = arith.constant 1 : i32
    %1 = tpu.dynamic_rotate %0 by %c1_i32 dim 0 : vector<8x128xf32>, i32 -> vector<8x128xf32>
    %c0_1 = arith.constant 0 : index
    %c0_2 = arith.constant 0 : index
    %2 = vector.load %arg1[%c0_1, %c0_2] : memref<8x128xf32, #tpu.memory_space<vmem>>, vector<8x128xf32>
    tpu.vector_store %arg1[%c0_1, %c0_2], %1 {strides = array<i32>} : memref<8x128xf32, #tpu.memory_space<vmem>>, vector<8x128xf32>,
    return
  }
}

</mosaic_0001>

<llo_original>
// kernel: tpu_custom_call.1
$region0: #{tpu_custom_call.1}
  #allocation0 [shape = 'u32[]', space=smem, size = 0x4, offset = 0x4, fixed_abs, tag = 'smem constant byte address 0x4 - core index']
  #allocation1 [shape = 'u32[72,128]{1,0:T(1,128)}', space=vmem, size = 0x9000, scoped, tag = 'internal scratch']
  %s0 = inlined_call_operand.hbm [shape: f32[8,128], index: 0, kind: input, shape index: {}]
  %s1 = inlined_call_operand.hbm [shape: f32[8,128], index: 1, kind: output, shape index: {}]
  %s2 = sld [smem:[#allocation0]]
  $region18: #{tpu_custom_call.1} parent=0
    _
  %s4 = ssub.s32 1, %s2
  %s5 = scalar_select 0, %s4, %s2
  $region1: #{tpu_custom_call.1} parent=0
    #allocation2 [shape = 'u8[4096]{0}', space=vmem, size = 0x1000, scoped, tag = 'input window, operand 0, single buffered']
    #allocation3 [shape = 's32[1]{0}', space=sflag, size = 0x4, scoped, tag = 'scoped memory for tpu_custom_call.1']
    #allocation4 [shape = 's32[1]{0}', space=sflag, size = 0x4, scoped, tag = 'scoped memory for tpu_custom_call.1']
    #allocation5 [shape = 'u8[4096]{0}', space=vmem, size = 0x1000, scoped, tag = 'output window, operand 0, single buffered']
    %6 = vsyncpa [#allocation3], 0
    %7 = vsyncpa [#allocation4], 0
    // Predicated region
    $region2: #{tpu_custom_call.1} parent=1 // pred_check
      _
    $region3: #{tpu_custom_call.1} parent=1 // pred_check_branch
      %9 = sbr.rel (0) target = $region5
    $region4: #{tpu_custom_call.1} parent=1 // pred_region
      %11 = vsyncadd [#allocation3], 0
      %s13 = sshll.u32 %s0, 4
      %s14 = int_to_ptr.hbm [resolvable:$true] %s13
      %s15 = sshll.u32 [#allocation2], 4
      %s16 = int_to_ptr.vmem [resolvable:$true] %s15
      %18 = dma.hbm_to_vmem [thread:$0]  %s14, 128, %s16, [#allocation3]
    $region5: #{tpu_custom_call.1} parent=1 // pred_fallthru
      _
    // Predicated region
    $region6: #{tpu_custom_call.1} parent=1 // pred_check
      _
    $region7: #{tpu_custom_call.1} parent=1 // pred_check_branch
      %20 = sbr.rel (0) target = $region9
    $region8: #{tpu_custom_call.1} parent=1 // pred_region
      %22 = dma.done [#allocation3], 128
    $region9: #{tpu_custom_call.1} parent=1 // pred_fallthru
      _
    %v23 = vld [vmem:[#allocation2] sm:$0xff]
    %v24 = vrot.slane %v23, 7
    %25 = vst [vmem:[#allocation5] sm:$0xff] %v24
    // Predicated region
    $region10: #{tpu_custom_call.1} parent=1 // pred_check
      _
    $region11: #{tpu_custom_call.1} parent=1 // pred_check_branch
      %27 = sbr.rel (0) target = $region13
    $region12: #{tpu_custom_call.1} parent=1 // pred_region
      %29 = vsyncadd [#allocation4], 0
      %s31 = sshll.u32 [#allocation5], 4
      %s32 = int_to_ptr.vmem [resolvable:$true] %s31
      %s33 = sshll.u32 %s1, 4
      %s34 = int_to_ptr.hbm [resolvable:$true] %s33
      %36 = dma.vmem_to_hbm [thread:$0]  %s32, 128, %s34, [#allocation4]
    $region13: #{tpu_custom_call.1} parent=1 // pred_fallthru
      _
    // Predicated region
    $region14: #{tpu_custom_call.1} parent=1 // pred_check
      _
    $region15: #{tpu_custom_call.1} parent=1 // pred_check_branch
      %38 = sbr.rel (0) target = $region17
    $region16: #{tpu_custom_call.1} parent=1 // pred_region
      %40 = dma.done [#allocation4], 128
    $region17: #{tpu_custom_call.1} parent=1 // pred_fallthru
      _
    %41 = vsyncpa [#allocation3], 1
    %42 = vsyncpa [#allocation4], 1

</llo_original>
